<compile_context>
chip_gen: v6e
topology: v6e:2x2x1
jax: 0.10.0
libtpu: 0.0.40
codegen_flags: <defaults>
</compile_context>

<pallas_src>
import math
import jax
import jax.numpy as jnp
from jax.experimental import pallas as pl
from jax.experimental.pallas import tpu as pltpu


def _build_pe(d_model: int, max_len: int = 1000) -> jnp.ndarray:
    """Sinusoidal PE buffer, identical to the PyTorch __init__. Shape [max_len, d_model]."""
    position = jnp.arange(0, max_len, dtype=jnp.float32)[:, None]                  # [L, 1]
    div_term = jnp.exp(jnp.arange(0, d_model, 2, dtype=jnp.float32)
                       * (-math.log(10000.0) / d_model))                           # [D/2]
    pe = jnp.zeros((max_len, d_model), dtype=jnp.float32)
    pe = pe.at[:, 0::2].set(jnp.sin(position * div_term))
    pe = pe.at[:, 1::2].set(jnp.cos(position * div_term))
    return pe


def _embed_pe_kernel(x_ref, w_ref, b_ref, pe_ref, o_ref):
    # x_ref : [tr, F]   tile of flattened (batch*time) input rows (streamed)
    # w_ref : [F, D]    feature_layer weight (pre-transposed), VMEM-resident
    # b_ref : [1, D]    feature_layer bias, VMEM-resident
    # pe_ref: [tr, D]   positional-encoding rows for one tile (same block every step)
    # o_ref : [tr, D]
    y = jnp.dot(x_ref[...], w_ref[...], preferred_element_type=jnp.float32)   # MXU
    y = y + b_ref[...] + pe_ref[...]                                          # VPU filler under the matmul
    o_ref[...] = y.astype(o_ref.dtype)                                        # explicit cast (bf16-safe)


def _pick_batch_tile(n_batch: int, seq_len: int, target_rows: int) -> int:
    """Largest bt dividing n_batch with bt*seq_len <= target_rows and sublane-aligned rows."""
    best = None
    for bt in range(1, n_batch + 1):
        if n_batch % bt:
            continue
        rows = bt * seq_len
        if rows > max(target_rows, seq_len):
            continue
        if rows % 8 == 0:                     # (8, 128) sublane alignment for the row tile
            best = bt
    if best is None:
        best = n_batch                        # single full-extent block: always a legal block shape
    return best


def feature_pos_embed(src, weight, bias, pe, *, target_rows=512):
    """Fused feature_layer + PositionalEncoding of TransformerT2V.

    src:    [N, T, F] float   (batch, seq, d_feat)
    weight: [D, F]            (torch nn.Linear layout)
    bias:   [D]
    pe:     [max_len, D]
    returns [N, T, D] = src @ weight.T + bias + pe[:T] (broadcast over N)
    """
    N, T, F = src.shape
    D = weight.shape[0]
    if T > pe.shape[0]:
        raise ValueError(f"sequence length {T} exceeds positional-encoding max_len {pe.shape[0]}")

    # Glue (plain XLA layout plumbing, not compute): flatten (N, T) rows so the
    # kernel is a plain 2-D matmul; pre-tile the PE rows to exactly one row-tile
    # so the kernel does no cross-sublane broadcast and the PE block is DMA'd
    # once and stays resident (its index_map returns the same block every step).
    bt = _pick_batch_tile(N, T, target_rows)
    tr = bt * T                               # rows per tile (multiple of T -> whole batch elements)
    R = N * T
    x2 = src.reshape(R, F)
    wt = jnp.transpose(weight)                # [F, D]
    b2 = bias.reshape(1, D)
    pe_tile = jnp.tile(pe[:T], (bt, 1))       # [tr, D], identical for every tile

    # NOTE: for large S*B*D, raise pltpu.CompilerParams(vmem_limit_bytes=...) and
    # grow target_rows toward ~512-1024 sublane rows (halve on v7x's 64 MiB VMEM).
    out2 = pl.pallas_call(
        _embed_pe_kernel,
        out_shape=jax.ShapeDtypeStruct((R, D), src.dtype),
        grid_spec=pltpu.PrefetchScalarGridSpec(
            num_scalar_prefetch=0,
            grid=(R // tr,),
            in_specs=[
                pl.BlockSpec((tr, F), lambda i: (i, 0)),   # streamed input rows
                pl.BlockSpec((F, D), lambda i: (0, 0)),    # weight: resident
                pl.BlockSpec((1, D), lambda i: (0, 0)),    # bias:   resident
                pl.BlockSpec((tr, D), lambda i: (0, 0)),   # PE tile: resident
            ],
            out_specs=pl.BlockSpec((tr, D), lambda i: (i, 0)),
        ),
        compiler_params=pltpu.CompilerParams(
            # Independent row tiles: "parallel" lets the two TensorCores on v7x
            # split the grid; harmless on single-TC v5e/v6e.
            dimension_semantics=("parallel",),
        ),
    )(x2, wt, b2, pe_tile)
    return out2.reshape(N, T, D)


if __name__ == "__main__":
    # Small shapes consistent with TransformerT2V: batch=4, seq=8, d_feat=6, d_model=32.
    N, T, F, D = 4, 8, 6, 32
    MAX_LEN = 1000

    key = jax.random.PRNGKey(0)
    k_src, k_w, k_b = jax.random.split(key, 3)
    src = jax.random.normal(k_src, (N, T, F), dtype=jnp.float32)
    weight = jax.random.normal(k_w, (D, F), dtype=jnp.float32) * (1.0 / math.sqrt(F))
    bias = jax.random.normal(k_b, (D,), dtype=jnp.float32) * 0.01
    pe = _build_pe(D, MAX_LEN)                # deterministic buffer init (as in torch __init__)

    # target_rows=16 forces a 2-step grid at these tiny demo shapes so the
    # auto-pipeline (prefetch i+1 / writeback i-1) is actually exercised;
    # at real sizes leave the default (~512 rows per tile).
    out = feature_pos_embed(src, weight, bias, pe, target_rows=16)
    out = jax.block_until_ready(out)

    # Reference: feature_layer -> transpose -> +pe[:T] -> transpose, in plain JAX.
    ref = jnp.einsum("ntf,df->ntd", src, weight) + bias[None, None, :] + pe[:T][None, :, :]
    assert out.shape == (N, T, D)
    assert jnp.allclose(out, ref, atol=1e-5, rtol=1e-5), "mismatch vs reference"

    print("KERNEL_OK")
</pallas_src>

<mosaic_0001>
module attributes {stable_mosaic.version = 11 : i64} {
  func.func @_embed_pe_kernel(%arg0: i32, %arg1: memref<16x6xf32, #tpu.memory_space<vmem>>, %arg2: memref<6x32xf32, #tpu.memory_space<vmem>>, %arg3: memref<1x32xf32, #tpu.memory_space<vmem>>, %arg4: memref<16x32xf32, #tpu.memory_space<vmem>>, %arg5: memref<16x32xf32, #tpu.memory_space<vmem>>) attributes {dimension_semantics = [#tpu.dimension_semantics<parallel>], iteration_bounds = array<i64: 2>, scalar_prefetch = 0 : i64, scratch_operands = 0 : i64, tpu.core_type = #tpu.core_type<tc>, window_params = [{transform_indices = @transform_0, window_bounds = array<i64: 16, 6>}, {pipeline_mode = #tpu.pipeline_mode<synchronous>, transform_indices = @transform_1, window_bounds = array<i64: 6, 32>}, {pipeline_mode = #tpu.pipeline_mode<synchronous>, transform_indices = @transform_2, window_bounds = array<i64: 1, 32>}, {pipeline_mode = #tpu.pipeline_mode<synchronous>, transform_indices = @transform_3, window_bounds = array<i64: 16, 32>}, {transform_indices = @transform_4, window_bounds = array<i64: 16, 32>}]} {
    %c0 = arith.constant 0 : index
    %c0_0 = arith.constant 0 : index
    %0 = vector.load %arg1[%c0, %c0_0] : memref<16x6xf32, #tpu.memory_space<vmem>>, vector<16x6xf32>
    %c0_1 = arith.constant 0 : index
    %c0_2 = arith.constant 0 : index
    %1 = vector.load %arg2[%c0_1, %c0_2] : memref<6x32xf32, #tpu.memory_space<vmem>>, vector<6x32xf32>
    %cst = arith.constant dense<0.000000e+00> : vector<16x32xf32>
    %2 = tpu.matmul %0, %1, %cst {dimension_numbers = #tpu.dot_dimension_numbers<[1], [0], [0], [1], [0, 0, 1, 1], [], []>} : vector<16x6xf32>, vector<6x32xf32>, vector<16x32xf32> -> vector<16x32xf32>
    %c0_3 = arith.constant 0 : index
    %c0_4 = arith.constant 0 : index
    %3 = vector.load %arg3[%c0_3, %c0_4] : memref<1x32xf32, #tpu.memory_space<vmem>>, vector<1x32xf32>
    %4 = vector.broadcast %3 : vector<1x32xf32> to vector<16x32xf32>
    %5 = arith.addf %2, %4 : vector<16x32xf32>
    %c0_5 = arith.constant 0 : index
    %c0_6 = arith.constant 0 : index
    %6 = vector.load %arg4[%c0_5, %c0_6] : memref<16x32xf32, #tpu.memory_space<vmem>>, vector<16x32xf32>
    %7 = arith.addf %5, %6 : vector<16x32xf32>
    %c0_7 = arith.constant 0 : index
    %c0_8 = arith.constant 0 : index
    %8 = vector.load %arg5[%c0_7, %c0_8] : memref<16x32xf32, #tpu.memory_space<vmem>>, vector<16x32xf32>
    tpu.vector_store %arg5[%c0_7, %c0_8], %7 {strides = array<i32>} : memref<16x32xf32, #tpu.memory_space<vmem>>, vector<16x32xf32>,
    return
  }
  func.func @transform_0(%arg0: i32) -> (i32, i32) {
    %c0_i32 = arith.constant 0 : i32
    %c0_i32_0 = arith.constant 0 : i32
    return %arg0, %c0_i32 : i32, i32
  }
  func.func @transform_1(%arg0: i32) -> (i32, i32) {
    %c0_i32 = arith.constant 0 : i32
    %c0_i32_0 = arith.constant 0 : i32
    %c0_i32_1 = arith.constant 0 : i32
    return %c0_i32, %c0_i32_0 : i32, i32
  }
  func.func @transform_2(%arg0: i32) -> (i32, i32) {
    %c0_i32 = arith.constant 0 : i32
    %c0_i32_0 = arith.constant 0 : i32
    %c0_i32_1 = arith.constant 0 : i32
    return %c0_i32, %c0_i32_0 : i32, i32
  }
  func.func @transform_3(%arg0: i32) -> (i32, i32) {
    %c0_i32 = arith.constant 0 : i32
    %c0_i32_0 = arith.constant 0 : i32
    %c0_i32_1 = arith.constant 0 : i32
    return %c0_i32, %c0_i32_0 : i32, i32
  }
  func.func @transform_4(%arg0: i32) -> (i32, i32) {
    %c0_i32 = arith.constant 0 : i32
    %c0_i32_0 = arith.constant 0 : i32
    return %arg0, %c0_i32 : i32, i32
  }
}

</mosaic_0001>

<llo_original>
// kernel: tpu_custom_call.1
$region0: #{tpu_custom_call.1}
  #allocation0 [shape = 'u32[]', space=smem, size = 0x4, offset = 0x4, fixed_abs, tag = 'smem constant byte address 0x4 - core index']
  #allocation1 [shape = 'u32[144,128]{1,0:T(1,128)}', space=vmem, size = 0x12000, scoped, tag = 'internal scratch']
  %s0 = inlined_call_operand.vmem [shape: f32[32,6], index: 0, kind: input, shape index: {}]
  %s1 = inlined_call_operand.vmem [shape: f32[6,32], index: 1, kind: input, shape index: {}]
  %s2 = inlined_call_operand.vmem [shape: f32[1,32], index: 2, kind: input, shape index: {}]
  %s3 = inlined_call_operand.vmem [shape: f32[16,32], index: 3, kind: input, shape index: {}]
  %s4 = inlined_call_operand.hbm [shape: f32[32,32], index: 4, kind: output, shape index: {}]
  %s5 = sld [smem:[#allocation0]]
  $region49: #{tpu_custom_call.1} parent=0
    _
  %s7 = ssub.s32 1, %s5
  %s8 = scalar_select 0, %s7, %s5
  $region1: #{tpu_custom_call.1} parent=0
    #allocation2 [shape = 'u8[16384]{0}', space=vmem, size = 0x4000, scoped, tag = 'output window, operand 0']
    #allocation3 [shape = 's32[2]{0}', space=sflag, size = 0x8, scoped, tag = 'scoped memory for tpu_custom_call.1']
    %9 = vsyncpa [#allocation3], 0
    %s10 = scalar_lea.sflag [#allocation3], 1
    %11 = vsyncpa %s10, 0
    loop: start=0, step=1, limit=4
    $region2: #{tpu_custom_call.1} parent=1 // loop_pre_header
      _
    $region3: #{tpu_custom_call.1} parent=1 // loop_header
      %s13 = sphi 0, %s17
      %p14 = scmp.ge.s32.totalorder %s13, 4
      %s23 = sphi 0, %s25
      %s26 = sphi 0, %s23
      %s27 = sphi 0, %s26
      %s43 = sphi 0, %s27
      %s47 = sphi 0, %s47
      %s49 = sphi 0, %s47
      %s50 = sphi 0, %s49
      %s64 = sphi 0, %s50
      %s68 = sphi 0, %s68
      %s70 = sphi 0, %s68
      %s71 = sphi 0, %s70
      %s85 = sphi 0, %s71
      %s89 = sphi 0, %s89
      %s91 = sphi 0, %s89
      %s92 = sphi 0, %s91
      %s106 = sphi 0, %s92
      %s112 = sphi 0, %s114
      %s115 = sphi 0, %s112
      %s116 = sphi 0, %s115
      %s132 = sphi 0, %s116
    $region4: #{tpu_custom_call.1} parent=1 // loop_header_branch
      %16 = sbr.rel (%p14) target = $region8
    $region5: #{tpu_custom_call.1} parent=1 // loop_body
      %s18 = ssub.s32 %s13, 1
      %s19 = ssub.s32 %s13, 2
      %s20 = sadd.s32 %s13, 1
      %s21 = ssub.s32 %s13, %s20
      %p22 = scmp.eq.s32.totalorder %s21, 0
      %s24 = sadd.s32 %s23, 1
      %s25 = scalar_select %p22, %s23, %s24
      %p28 = pneg %p22
      %p29 = scmp.eq.s32.totalorder %s13, 1
      %p30 = por %p28, %p29
      %p31 = scmp.ne.s32.totalorder %s23, %s26
      %p32 = scmp.eq.s32.totalorder %s13, 0
      %p33 = por %p31, %p32
      %p34 = scmp.ne.s32.totalorder %s23, %s26
      %p35 = scmp.eq.s32.totalorder %s18, 1
      %p36 = por %p34, %p35
      %p37 = scmp.ne.s32.totalorder %s26, %s27
      %p38 = scmp.eq.s32.totalorder %s18, 0
      %p39 = por %p37, %p38
      %p40 = scmp.ne.s32.totalorder %s26, %s27
      %p41 = scmp.eq.s32.totalorder %s19, 1
      %p42 = por %p40, %p41
      %p44 = scmp.ne.s32.totalorder %s27, %s43
      %p45 = scmp.eq.s32.totalorder %s19, 0
      %p46 = por %p44, %p45
      %s48 = sadd.s32 %s47, 1
      %p51 = scmp.eq.s32.totalorder %s13, 1
      %p52 = scmp.ne.s32.totalorder %s47, %s49
      %p53 = scmp.eq.s32.totalorder %s13, 0
      %p54 = por %p52, %p53
      %p55 = scmp.ne.s32.totalorder %s47, %s49
      %p56 = scmp.eq.s32.totalorder %s18, 1
      %p57 = por %p55, %p56
      %p58 = scmp.ne.s32.totalorder %s49, %s50
      %p59 = scmp.eq.s32.totalorder %s18, 0
      %p60 = por %p58, %p59
      %p61 = scmp.ne.s32.totalorder %s49, %s50
      %p62 = scmp.eq.s32.totalorder %s19, 1
      %p63 = por %p61, %p62
      %p65 = scmp.ne.s32.totalorder %s50, %s64
      %p66 = scmp.eq.s32.totalorder %s19, 0
      %p67 = por %p65, %p66
      %s69 = sadd.s32 %s68, 1
      %p72 = scmp.eq.s32.totalorder %s13, 1
      %p73 = scmp.ne.s32.totalorder %s68, %s70
      %p74 = scmp.eq.s32.totalorder %s13, 0
      %p75 = por %p73, %p74
      %p76 = scmp.ne.s32.totalorder %s68, %s70
      %p77 = scmp.eq.s32.totalorder %s18, 1
      %p78 = por %p76, %p77
      %p79 = scmp.ne.s32.totalorder %s70, %s71
      %p80 = scmp.eq.s32.totalorder %s18, 0
      %p81 = por %p79, %p80
      %p82 = scmp.ne.s32.totalorder %s70, %s71
      %p83 = scmp.eq.s32.totalorder %s19, 1
      %p84 = por %p82, %p83
      %p86 = scmp.ne.s32.totalorder %s71, %s85
      %p87 = scmp.eq.s32.totalorder %s19, 0
      %p88 = por %p86, %p87
      %s90 = sadd.s32 %s89, 1
      %p93 = scmp.eq.s32.totalorder %s13, 1
      %p94 = scmp.ne.s32.totalorder %s89, %s91
      %p95 = scmp.eq.s32.totalorder %s13, 0
      %p96 = por %p94, %p95
      %p97 = scmp.ne.s32.totalorder %s89, %s91
      %p98 = scmp.eq.s32.totalorder %s18, 1
      %p99 = por %p97, %p98
      %p100 = scmp.ne.s32.totalorder %s91, %s92
      %p101 = scmp.eq.s32.totalorder %s18, 0
      %p102 = por %p100, %p101
      %p103 = scmp.ne.s32.totalorder %s91, %s92
      %p104 = scmp.eq.s32.totalorder %s19, 1
      %p105 = por %p103, %p104
      %p107 = scmp.ne.s32.totalorder %s92, %s106
      %p108 = scmp.eq.s32.totalorder %s19, 0
      %p109 = por %p107, %p108
      %s110 = ssub.s32 %s13, %s20
      %p111 = scmp.eq.s32.totalorder %s110, 0
      %s113 = sadd.s32 %s112, 1
      %s114 = scalar_select %p111, %s112, %s113
      %p117 = pneg %p111
      %p118 = scmp.eq.s32.totalorder %s13, 1
      %p119 = por %p117, %p118
      %p120 = scmp.ne.s32.totalorder %s112, %s115
      %p121 = scmp.eq.s32.totalorder %s13, 0
      %p122 = por %p120, %p121
      %p123 = scmp.ne.s32.totalorder %s112, %s115
      %p124 = scmp.eq.s32.totalorder %s18, 1
      %p125 = por %p123, %p124
      %p126 = scmp.ne.s32.totalorder %s115, %s116
      %p127 = scmp.eq.s32.totalorder %s18, 0
      %p128 = por %p126, %p127
      %p129 = scmp.ne.s32.totalorder %s115, %s116
      %p130 = scmp.eq.s32.totalorder %s19, 1
      %p131 = por %p129, %p130
      %p133 = scmp.ne.s32.totalorder %s116, %s132
      %p134 = scmp.eq.s32.totalorder %s19, 0
      %p135 = por %p133, %p134
      %p136 = scmp.le.s32.totalorder 1, %s13
      %p137 = scmp.lt.s32.totalorder %s13, 3
      %p138 = pnand %p136, %p137
      %p139 = pneg %p138
      // Predicated region
      $region9: #{tpu_custom_call.1} parent=5 // pred_check
        _
      $region10: #{tpu_custom_call.1} parent=5 // pred_check_branch
        %141 = sbr.rel (%p138) target = $region12
      $region11: #{tpu_custom_call.1} parent=5 // pred_region
        %s142 = ssub.s32 %s13, 1
        // Predicated region
        $region13: #{tpu_custom_call.1} parent=11 // pred_check
          %p143 = pneg %p60
        $region14: #{tpu_custom_call.1} parent=11 // pred_check_branch
          %145 = sbr.rel (%p143) target = $region16
        $region15: #{tpu_custom_call.1} parent=11 // pred_region
          _
        $region16: #{tpu_custom_call.1} parent=11 // pred_fallthru
          _
        // Predicated region
        $region17: #{tpu_custom_call.1} parent=11 // pred_check
          %p146 = pneg %p81
        $region18: #{tpu_custom_call.1} parent=11 // pred_check_branch
          %148 = sbr.rel (%p146) target = $region20
        $region19: #{tpu_custom_call.1} parent=11 // pred_region
          _
        $region20: #{tpu_custom_call.1} parent=11 // pred_fallthru
          _
        // Predicated region
        $region21: #{tpu_custom_call.1} parent=11 // pred_check
          %p149 = pneg %p102
        $region22: #{tpu_custom_call.1} parent=11 // pred_check_branch
          %151 = sbr.rel (%p149) target = $region24
        $region23: #{tpu_custom_call.1} parent=11 // pred_region
          _
        $region24: #{tpu_custom_call.1} parent=11 // pred_fallthru
          _
      $region12: #{tpu_custom_call.1} parent=5 // pred_fallthru
        _
      %p152 = scmp.lt.s32.totalorder %s13, 2
      // Predicated region
      $region25: #{tpu_custom_call.1} parent=5 // pred_check
        %p153 = pneg %p152
      $region26: #{tpu_custom_call.1} parent=5 // pred_check_branch
        %155 = sbr.rel (%p153) target = $region28
      $region27: #{tpu_custom_call.1} parent=5 // pred_region
        // Predicated region
        $region29: #{tpu_custom_call.1} parent=27 // pred_check
          %p156 = pneg %p33
        $region30: #{tpu_custom_call.1} parent=27 // pred_check_branch
          %158 = sbr.rel (%p156) target = $region32
        $region31: #{tpu_custom_call.1} parent=27 // pred_region
          %s159 = smul.u32 2, %s13
          %p160 = scmp.lt.s32.totalorder %s159, 3
          %s161 = scalar_select %p160, %s159, 3
          %s162 = smul.addr %s161, 8
          %s163 = scalar_lea.vmem %s0, %s162
          %s164 = smul.u32 2, %s13
        $region32: #{tpu_custom_call.1} parent=27 // pred_fallthru
          _
      $region28: #{tpu_custom_call.1} parent=5 // pred_fallthru
        _
      %p165 = scmp.le.s32.totalorder 1, %s13
      %p166 = scmp.lt.s32.totalorder %s13, 3
      %p167 = pnand %p165, %p166
      %p168 = pneg %p167
      // Predicated region
      $region33: #{tpu_custom_call.1} parent=5 // pred_check
        _
      $region34: #{tpu_custom_call.1} parent=5 // pred_check_branch
        %170 = sbr.rel (%p167) target = $region36
      $region35: #{tpu_custom_call.1} parent=5 // pred_region
        %s171 = ssub.s32 %s13, 1
        %s172 = smul.u32 2, %s18
        %p173 = scmp.lt.s32.totalorder %s172, 3
        %s174 = scalar_select %p173, %s172, 3
        %s175 = smul.addr %s174, 8
        %s176 = scalar_lea.vmem %s0, %s175
        %p177 = pneg %p39
        %p178 = pneg %p36
        %p179 = pneg %p60
        %p180 = pneg %p57
        %p181 = pneg %p81
        %p182 = pneg %p78
        %p183 = pneg %p102
        %p184 = pneg %p99
        %p185 = pneg %p128
        %p186 = pneg %p125
        %s187 = sand.u32 %s115, 1
        %s188 = scalar_lea.sflag [#allocation3], %s187
        %s189 = sand.u32 %s115, 1
        %s190 = smul.addr %s189, 16
        %s191 = scalar_lea.vmem [#allocation2], %s190
        %s192 = smul.u32 2, %s18
        %p193 = scmp.lt.s32.totalorder %s192, 3
        %s194 = scalar_select %p193, %s192, 3
        %s195 = smul.addr %s194, 8
        %s196 = scalar_lea.vmem %s0, %s195
        %s197 = smul.u32 2, %s18
        %s198 = smul.u32 2, %s18
        %v199 = vld [vmem:[%s196] sm:$0xff]
        %v200 = vld [vmem:[%s196 + $0x8] sm:$0xff]
        %v201 = vld [vmem:[%s1] sm:$0x3f]
        %v202 = vld [vmem:[%s2] sm:$0x1]
        %v204 = vlaneseq
        %v205 = vshrl.u32 %v204, 7
        %v206 = vsub.s32 0, %v205
        %v207 = vrot.slane %v202, %v206
        %vm209 = vcmask 48128
        %v211 = vsel %vm209, %v199, 0
        %v214 = vsel %vm209, %v200, 0
        %vm216 = vcmask 1045504
        %v218 = vsel %vm216, %v201, 0
        %220 = vmatprep.subr.mxu0 0.0
        %221 = vmatpush1.msra.mxu0 0.0
        %222 = vmatprep.subr.mxu0 0.0
        %223 = vmatpush1.msra.mxu0 0.0
        %224 = vmatprep.subr.mxu0 0.0
        %225 = vmatpush1.msra.mxu0 0.0
        %226 = vmatprep.subr.mxu0 0.0
        %227 = vmatpush1.msra.mxu0 0.0
        %228 = vmatprep.subr.mxu0 0.0
        %229 = vmatpush1.msra.mxu0 0.0
        %230 = vmatprep.subr.mxu0 0.0
        %231 = vmatpush1.msra.mxu0 0.0
        %232 = vmatprep.subr.mxu0 0.0
        %233 = vmatpush1.msra.mxu0 0.0
        %234 = vmatprep.subr.mxu0 0.0
        %235 = vmatpush1.msra.mxu0 0.0
        %236 = vmatprep.subr.mxu0 0.0
        %237 = vmatpush1.msra.mxu0 0.0
        %238 = vmatprep.subr.mxu0 0.0
        %239 = vmatpush1.msra.mxu0 0.0
        %240 = vmatprep.subr.mxu0 0.0
        %241 = vmatpush1.msra.mxu0 0.0
        %242 = vmatprep.subr.mxu0 0.0
        %243 = vmatpush1.msra.mxu0 0.0
        %244 = vmatprep.subr.mxu0 0.0
        %245 = vmatpush1.msra.mxu0 0.0
        %246 = vmatprep.subr.mxu0 0.0
        %247 = vmatpush1.msra.mxu0 0.0
        %248 = vmatprep.subr.mxu0 0.0
        %249 = vmatpush1.msra.mxu0 0.0
        %250 = vmatprep.subr.mxu0 0.0
        %251 = vmatpush1.msra.mxu0 %v218
        %252 = vmatprep.subr.mxu0 0.0
        %253 = vmatpush2.msra.mxu0 0.0
        %254 = vmatprep.subr.mxu0 0.0
        %255 = vmatpush2.msra.mxu0 0.0
        %256 = vmatprep.subr.mxu0 0.0
        %257 = vmatpush2.msra.mxu0 0.0
        %258 = vmatprep.subr.mxu0 0.0
        %259 = vmatpush2.msra.mxu0 0.0
        %260 = vmatprep.subr.mxu0 0.0
        %261 = vmatpush2.msra.mxu0 0.0
        %262 = vmatprep.subr.mxu0 0.0
        %263 = vmatpush2.msra.mxu0 0.0
        %264 = vmatprep.subr.mxu0 0.0
        %265 = vmatpush2.msra.mxu0 0.0
        %266 = vmatprep.subr.mxu0 0.0
        %267 = vmatpush2.msra.mxu0 0.0
        %268 = vmatprep.subr.mxu0 0.0
        %269 = vmatpush2.msra.mxu0 0.0
        %270 = vmatprep.subr.mxu0 0.0
        %271 = vmatpush2.msra.mxu0 0.0
        %272 = vmatprep.subr.mxu0 0.0
        %273 = vmatpush2.msra.mxu0 0.0
        %274 = vmatprep.subr.mxu0 0.0
        %275 = vmatpush2.msra.mxu0 0.0
        %276 = vmatprep.subr.mxu0 0.0
        %277 = vmatpush2.msra.mxu0 0.0
        %278 = vmatprep.subr.mxu0 0.0
        %279 = vmatpush2.msra.mxu0 0.0
        %280 = vmatprep.subr.mxu0 0.0
        %281 = vmatpush2.msra.mxu0 0.0
        %282 = vmatprep.subr.mxu0 0.0
        %283 = vmatpush2.msra.mxu0 0.0
        %284 = vmatprep.mubr.f32.mxu0 0.0
        %285 = vmatmul.mubr.f32.gmra.mxu0 %v211
        %v286 = vpop.f32.mrf.mxu0
        %v287 = vadd.f32 %v207, %v286
        %v288 = vpop.f32.mrf.mxu0
        %289 = vmatprep.mubr.f32.mxu0 0.0
        %290 = vmatmul.mubr.f32.gmra.mxu0 %v214
        %v291 = vpop.f32.mrf.mxu0
        %v292 = vadd.f32 %v207, %v291
        %v293 = vpop.f32.mrf.mxu0
        %294 = vdwg.mxu0
        %v295 = vld [vmem:[%s3] sm:$0xff]
        %v296 = vld [vmem:[%s3 + $0x8] sm:$0xff]
        %v297 = vadd.f32 %v287, %v295
        %v298 = vadd.f32 %v292, %v296
        %vm299 = vcmask 261120
        %300 = vst.msk [vmem:[%s191] sm:$0xff] %vm299, %v297
        %301 = vst.msk [vmem:[%s191 + $0x8] sm:$0xff] %vm299, %v298
        %s302 = sand.u32 %s115, 1
        %s303 = scalar_lea.sflag [#allocation3], %s302
        %s304 = sand.u32 %s115, 1
        %s305 = smul.addr %s304, 16
        %s306 = scalar_lea.vmem [#allocation2], %s305
        // Predicated region
        $region37: #{tpu_custom_call.1} parent=35 // pred_check
          %p307 = pneg %p125
        $region38: #{tpu_custom_call.1} parent=35 // pred_check_branch
          %309 = sbr.rel (%p307) target = $region40
        $region39: #{tpu_custom_call.1} parent=35 // pred_region
          %s310 = smul.u32 2, %s18
          %s312 = ssub.s32 256, 256
          %313 = vsyncadd %s303, %s312
          %s314 = smul.addr %s310, 128
          %s315 = scalar_lea.hbm %s4, %s314
          %s316 = sshll.u32 %s306, 4
          %s317 = int_to_ptr.vmem [resolvable:$true] %s316
          %322 = dma.vmem_to_hbm [thread:$0]  %s317, 256, %s315, %s303, 128, 128, 8
        $region40: #{tpu_custom_call.1} parent=35 // pred_fallthru
          _
      $region36: #{tpu_custom_call.1} parent=5 // pred_fallthru
        _
      %p323 = scmp.le.s32.totalorder 2, %s13
      // Predicated region
      $region41: #{tpu_custom_call.1} parent=5 // pred_check
        %p324 = pneg %p323
      $region42: #{tpu_custom_call.1} parent=5 // pred_check_branch
        %326 = sbr.rel (%p324) target = $region44
      $region43: #{tpu_custom_call.1} parent=5 // pred_region
        %s327 = ssub.s32 %s13, 2
        // Predicated region
        $region45: #{tpu_custom_call.1} parent=43 // pred_check
          %p328 = pneg %p131
        $region46: #{tpu_custom_call.1} parent=43 // pred_check_branch
          %330 = sbr.rel (%p328) target = $region48
        $region47: #{tpu_custom_call.1} parent=43 // pred_region
          %s331 = sand.u32 %s116, 1
          %s332 = scalar_lea.sflag [#allocation3], %s331
          %s333 = sand.u32 %s116, 1
          %s334 = smul.addr %s333, 16
          %s335 = scalar_lea.vmem [#allocation2], %s334
          %336 = dma.done %s332, 256
        $region48: #{tpu_custom_call.1} parent=43 // pred_fallthru
          _
      $region44: #{tpu_custom_call.1} parent=5 // pred_fallthru
        _
    $region6: #{tpu_custom_call.1} parent=1 // loop_footer
      %s17 = sadd.s32 1, %s13
    $region7: #{tpu_custom_call.1} parent=1 // loop_footer_branch
      %12 = sbr.rel target = $region3
    $region8: #{tpu_custom_call.1} parent=1 // loop_exit
      _
    %337 = vsyncpa [#allocation3], 1
    %s338 = scalar_lea.sflag [#allocation3], 1
    %339 = vsyncpa %s338, 1

</llo_original>
